<compile_context>
chip_gen: v7x
topology: tpu7x:2x2x1
jax: 0.10.0
libtpu: 0.0.40
codegen_flags: <defaults>
</compile_context>

<pallas_src>
import math

import jax
import jax.numpy as jnp
from jax import lax
from jax.experimental import pallas as pl
from jax.experimental.pallas import tpu as pltpu

# ---------------------------------------------------------------------------
# Model hyper-parameters (small, consistent with the module's __init__)
# ---------------------------------------------------------------------------
B = 2            # batch
S = 8            # sequence length (state / stored patterns)
D = 32           # d_model == hopfield_association.state_pattern_dim
NUM_HEADS = 2
HEAD_DIM = D // NUM_HEADS
DIM_FF = 64      # dim_feedforward
EPS = 1e-5       # nn.LayerNorm default eps
# hflayers default scaling = 1/sqrt(association hidden dim) == head_dim here.
SCALE = 1.0 / math.sqrt(HEAD_DIM)
M = B * S        # rows of every matmul after folding batch into sequence

# Packed parameter slab layout, f32, shape (SLAB_ROWS, 128):
#   rows [0,   D)        lanes [0,   3D) : fused Wqkv          (D, 3D)
#   rows [0,   D)        lanes [3D,  4D) : Wo                  (D, D)
#   rows [D,   2D)       lanes [0,   FF) : linear_residual  W1 (D, FF)
#   rows [2D,  2D+FF)    lanes [0,   D)  : linear_output    W2 (FF, D)
#   rows [VROW, VROW+8)                  : 8 packed bias / LayerNorm vectors
VROW = 2 * D + DIM_FF            # = 128
SLAB_ROWS = VROW + 8             # = 136 (multiple of 8)


# ---------------------------------------------------------------------------
# Pallas kernel: whole encoder layer in one grid step
# ---------------------------------------------------------------------------
def _encoder_kernel(src_ref, slab_ref, out_ref):
    x = src_ref[...].astype(jnp.float32)            # (M, D)
    slab = slab_ref[...]                            # (136, 128) f32, one load

    # ----- unpack weights (bf16 MXU operands) and f32 vectors -----
    w_qkv = slab[0:D, 0:3 * D].astype(jnp.bfloat16)              # (D, 3D)
    w_o   = slab[0:D, 3 * D:4 * D].astype(jnp.bfloat16)          # (D, D)
    w_1   = slab[D:2 * D, 0:DIM_FF].astype(jnp.bfloat16)         # (D, FF)
    w_2   = slab[2 * D:2 * D + DIM_FF, 0:D].astype(jnp.bfloat16) # (FF, D)

    b_qkv = slab[VROW + 0:VROW + 1, 0:3 * D]        # (1, 3D)
    b1    = slab[VROW + 1:VROW + 2, 0:DIM_FF]
    bo    = slab[VROW + 2:VROW + 3, 0:D]
    g_res = slab[VROW + 3:VROW + 4, 0:D]
    b_res = slab[VROW + 4:VROW + 5, 0:D]
    b2    = slab[VROW + 5:VROW + 6, 0:D]
    g_out = slab[VROW + 6:VROW + 7, 0:D]
    b_out = slab[VROW + 7:VROW + 8, 0:D]

    def layer_norm(v, g, b):
        mu = jnp.mean(v, axis=-1, keepdims=True)
        var = jnp.mean((v - mu) ** 2, axis=-1, keepdims=True)
        return (v - mu) * lax.rsqrt(var + EPS) * g + b

    # ----- Hopfield association (multi-head self attention), fused QKV -----
    qkv = jnp.dot(x.astype(jnp.bfloat16), w_qkv,
                  preferred_element_type=jnp.float32) + b_qkv     # (M, 3D) f32
    qkv3 = qkv.reshape(B, S, 3 * D)                               # batch split for attention only

    assoc = None
    for h in range(NUM_HEADS):                                    # static 2-iteration unroll
        c0 = h * HEAD_DIM
        qh = qkv3[:, :, c0:c0 + HEAD_DIM].astype(jnp.bfloat16)            # (B, S, hd)
        kh = qkv3[:, :, D + c0:D + c0 + HEAD_DIM].astype(jnp.bfloat16)    # (B, S, hd)
        vh = qkv3[:, :, 2 * D + c0:2 * D + c0 + HEAD_DIM].astype(jnp.bfloat16)

        s = jnp.einsum('bqd,bkd->bqk', qh, kh,
                       preferred_element_type=jnp.float32) * SCALE        # (B, S, S)
        m = jnp.max(s, axis=-1, keepdims=True)
        p = jnp.exp(s - m)
        p = p / jnp.sum(p, axis=-1, keepdims=True)                        # exact softmax
        oh = jnp.einsum('bqk,bkd->bqd', p.astype(jnp.bfloat16), vh,
                        preferred_element_type=jnp.float32)               # (B, S, hd)

        # head-merge via row-split of Wo (no lane concat on the serial path)
        part = jnp.dot(oh.reshape(M, HEAD_DIM).astype(jnp.bfloat16),
                       w_o[c0:c0 + HEAD_DIM, :],
                       preferred_element_type=jnp.float32)                # (M, D)
        assoc = part if assoc is None else assoc + part
    assoc = assoc + bo

    # ----- residual + LayerNorm (norm_residual) -----
    x1 = layer_norm(x + assoc, g_res, b_res)

    # ----- feed-forward: relu(linear_residual) -> linear_output -----
    hidden = jnp.maximum(
        jnp.dot(x1.astype(jnp.bfloat16), w_1,
                preferred_element_type=jnp.float32) + b1, 0.0)            # (M, FF)
    ff = jnp.dot(hidden.astype(jnp.bfloat16), w_2,
                 preferred_element_type=jnp.float32) + b2                 # (M, D)

    # ----- residual + LayerNorm (norm_output) -----
    y = layer_norm(x1 + ff, g_out, b_out)
    out_ref[...] = y.astype(out_ref.dtype)


# ---------------------------------------------------------------------------
# Wrapper
# ---------------------------------------------------------------------------
def _pack_params(params):
    """Pack all weights / biases / LayerNorm vectors into one (136,128) f32 slab."""
    (wq, bq, wk, bk, wv, bv, wo, bo,
     g_res, b_res, w1, b1, w2, b2, g_out, b_out) = params

    wqkv = jnp.concatenate([wq, wk, wv], axis=1)                # (D, 3D)
    bqkv = jnp.concatenate([bq, bk, bv], axis=1)                # (1, 3D)

    slab = jnp.zeros((SLAB_ROWS, 128), jnp.float32)
    slab = slab.at[0:D, 0:3 * D].set(wqkv)
    slab = slab.at[0:D, 3 * D:4 * D].set(wo)
    slab = slab.at[D:2 * D, 0:DIM_FF].set(w1)
    slab = slab.at[2 * D:2 * D + DIM_FF, 0:D].set(w2)
    slab = slab.at[VROW + 0, 0:3 * D].set(bqkv[0])
    slab = slab.at[VROW + 1, 0:DIM_FF].set(b1[0])
    slab = slab.at[VROW + 2, 0:D].set(bo[0])
    slab = slab.at[VROW + 3, 0:D].set(g_res[0])
    slab = slab.at[VROW + 4, 0:D].set(b_res[0])
    slab = slab.at[VROW + 5, 0:D].set(b2[0])
    slab = slab.at[VROW + 6, 0:D].set(g_out[0])
    slab = slab.at[VROW + 7, 0:D].set(b_out[0])
    return slab


def hopfield_encoder_layer(src, params):
    """src: (B, S, D) float32, batch-first layout."""
    slab = _pack_params(params)
    src2d = src.reshape(M, D)           # fold batch outside the kernel

    out2d = pl.pallas_call(
        _encoder_kernel,
        out_shape=jax.ShapeDtypeStruct((M, D), src.dtype),
        grid_spec=pltpu.PrefetchScalarGridSpec(
            num_scalar_prefetch=0,
            grid=(1,),                                           # single step on all TPU gens
            in_specs=[pl.BlockSpec((M, D), lambda i: (0, 0)),
                      pl.BlockSpec((SLAB_ROWS, 128), lambda i: (0, 0))],
            out_specs=pl.BlockSpec((M, D), lambda i: (0, 0)),
        ),
        compiler_params=pltpu.CompilerParams(
            dimension_semantics=("arbitrary",)),
    )(src2d, slab)
    return out2d.reshape(B, S, D)


# ---------------------------------------------------------------------------
# Deterministic parameter construction (synthetic, no checkpoint)
# ---------------------------------------------------------------------------
def make_params(key):
    keys = jax.random.split(key, 6)

    def lin(k, fan_in, fan_out):
        # uniform(-1/sqrt(fan_in), 1/sqrt(fan_in)), like nn.Linear.reset_parameters
        bound = 1.0 / math.sqrt(fan_in)
        kw, kb = jax.random.split(k)
        w = jax.random.uniform(kw, (fan_in, fan_out), jnp.float32, -bound, bound)
        b = jax.random.uniform(kb, (1, fan_out), jnp.float32, -bound, bound)
        return w, b

    wq, bq = lin(keys[0], D, D)
    wk, bk = lin(keys[1], D, D)
    wv, bv = lin(keys[2], D, D)
    wo, bo = lin(keys[3], D, D)
    g_res = jnp.ones((1, D), jnp.float32)
    b_res = jnp.zeros((1, D), jnp.float32)
    w1, b1 = lin(keys[4], D, DIM_FF)
    w2, b2 = lin(keys[5], DIM_FF, D)
    g_out = jnp.ones((1, D), jnp.float32)
    b_out = jnp.zeros((1, D), jnp.float32)
    return (wq, bq, wk, bk, wv, bv, wo, bo,
            g_res, b_res, w1, b1, w2, b2, g_out, b_out)


# ---------------------------------------------------------------------------
# Pure-JAX reference.  matmul_dtype=float32 -> exact PyTorch-style reference;
# matmul_dtype=bfloat16 -> mirrors the kernel's operand-cast / f32-accumulate
# policy so the kernel logic can be checked at tight tolerance.
# ---------------------------------------------------------------------------
def reference(src, params, matmul_dtype=jnp.float32):
    (wq, bq, wk, bk, wv, bv, wo, bo,
     g_res, b_res, w1, b1, w2, b2, g_out, b_out) = params
    md = matmul_dtype

    def mm(a, w):
        return jnp.dot(a.astype(md), w.astype(md),
                       preferred_element_type=jnp.float32)

    def ln(x, g, b):
        mu = jnp.mean(x, -1, keepdims=True)
        var = jnp.mean((x - mu) ** 2, -1, keepdims=True)
        return (x - mu) * lax.rsqrt(var + EPS) * g + b

    x = src.astype(jnp.float32)
    q = mm(x, wq) + bq
    k = mm(x, wk) + bk
    v = mm(x, wv) + bv
    qh = q.reshape(B, S, NUM_HEADS, HEAD_DIM).transpose(0, 2, 1, 3)
    kh = k.reshape(B, S, NUM_HEADS, HEAD_DIM).transpose(0, 2, 1, 3)
    vh = v.reshape(B, S, NUM_HEADS, HEAD_DIM).transpose(0, 2, 1, 3)
    s = jnp.einsum('bhqd,bhkd->bhqk', qh.astype(md), kh.astype(md),
                   preferred_element_type=jnp.float32) * SCALE
    m = jnp.max(s, -1, keepdims=True)
    p = jnp.exp(s - m)
    p = p / jnp.sum(p, -1, keepdims=True)
    z = jnp.einsum('bhqk,bhkd->bhqd', p.astype(md), vh.astype(md),
                   preferred_element_type=jnp.float32)
    z = z.transpose(0, 2, 1, 3).reshape(B, S, D)
    z = mm(z, wo) + bo
    x = ln(x + z, g_res, b_res)
    h = jnp.maximum(mm(x, w1) + b1, 0.0)
    x = ln(x + (mm(h, w2) + b2), g_out, b_out)
    return x


# ---------------------------------------------------------------------------
if __name__ == "__main__":
    key = jax.random.PRNGKey(0)
    k_src, k_par = jax.random.split(key)
    src = jax.random.normal(k_src, (B, S, D), jnp.float32)
    params = make_params(k_par)

    out = hopfield_encoder_layer(src, params)
    out = jax.block_until_ready(out)
    assert out.shape == (B, S, D)

    # Strict check: same bf16-operand / f32-accumulate policy as the kernel.
    ref_matched = reference(src, params, matmul_dtype=jnp.bfloat16)
    err_strict = float(jnp.max(jnp.abs(out - ref_matched)))
    assert err_strict < 1e-3, f"matched-precision max err {err_strict}"

    # Loose check: pure-f32 reference; deviation is the bf16 operand rounding
    # (measured well below this bound at these shapes).
    ref_f32 = reference(src, params, matmul_dtype=jnp.float32)
    err_f32 = float(jnp.max(jnp.abs(out - ref_f32)))
    assert err_f32 < 3e-2, f"f32-reference max err {err_f32}"

    print("KERNEL_OK")
</pallas_src>

<mosaic_0001>
module attributes {stable_mosaic.version = 11 : i64} {
  func.func @_encoder_kernel(%arg0: i32, %arg1: memref<16x32xf32, #tpu.memory_space<vmem>>, %arg2: memref<136x128xf32, #tpu.memory_space<vmem>>, %arg3: memref<16x32xf32, #tpu.memory_space<vmem>>) attributes {dimension_semantics = [#tpu.dimension_semantics<arbitrary>], iteration_bounds = array<i64: 1>, scalar_prefetch = 0 : i64, scratch_operands = 0 : i64, tpu.core_type = #tpu.core_type<tc>, window_params = [{pipeline_mode = #tpu.pipeline_mode<synchronous>, transform_indices = @transform_0, window_bounds = array<i64: 16, 32>}, {pipeline_mode = #tpu.pipeline_mode<synchronous>, transform_indices = @transform_1, window_bounds = array<i64: 136, 128>}, {pipeline_mode = #tpu.pipeline_mode<synchronous>, transform_indices = @transform_2, window_bounds = array<i64: 16, 32>}]} {
    %c0 = arith.constant 0 : index
    %c0_0 = arith.constant 0 : index
    %0 = vector.load %arg1[%c0, %c0_0] : memref<16x32xf32, #tpu.memory_space<vmem>>, vector<16x32xf32>
    %c0_1 = arith.constant 0 : index
    %c0_2 = arith.constant 0 : index
    %1 = vector.load %arg2[%c0_1, %c0_2] : memref<136x128xf32, #tpu.memory_space<vmem>>, vector<136x128xf32>
    %2 = vector.extract_strided_slice %1 {offsets = [0, 0], sizes = [32, 96], strides = [1, 1]} : vector<136x128xf32> to vector<32x96xf32>
    %3 = arith.truncf %2 : vector<32x96xf32> to vector<32x96xbf16>
    %4 = vector.extract_strided_slice %1 {offsets = [0, 96], sizes = [32, 32], strides = [1, 1]} : vector<136x128xf32> to vector<32x32xf32>
    %5 = arith.truncf %4 : vector<32x32xf32> to vector<32x32xbf16>
    %6 = vector.extract_strided_slice %1 {offsets = [32, 0], sizes = [32, 64], strides = [1, 1]} : vector<136x128xf32> to vector<32x64xf32>
    %7 = arith.truncf %6 : vector<32x64xf32> to vector<32x64xbf16>
    %8 = vector.extract_strided_slice %1 {offsets = [64, 0], sizes = [64, 32], strides = [1, 1]} : vector<136x128xf32> to vector<64x32xf32>
    %9 = arith.truncf %8 : vector<64x32xf32> to vector<64x32xbf16>
    %10 = vector.extract_strided_slice %1 {offsets = [128, 0], sizes = [1, 96], strides = [1, 1]} : vector<136x128xf32> to vector<1x96xf32>
    %11 = vector.extract_strided_slice %1 {offsets = [129, 0], sizes = [1, 64], strides = [1, 1]} : vector<136x128xf32> to vector<1x64xf32>
    %12 = vector.extract_strided_slice %1 {offsets = [130, 0], sizes = [1, 32], strides = [1, 1]} : vector<136x128xf32> to vector<1x32xf32>
    %13 = vector.extract_strided_slice %1 {offsets = [131, 0], sizes = [1, 32], strides = [1, 1]} : vector<136x128xf32> to vector<1x32xf32>
    %14 = vector.extract_strided_slice %1 {offsets = [132, 0], sizes = [1, 32], strides = [1, 1]} : vector<136x128xf32> to vector<1x32xf32>
    %15 = vector.extract_strided_slice %1 {offsets = [133, 0], sizes = [1, 32], strides = [1, 1]} : vector<136x128xf32> to vector<1x32xf32>
    %16 = vector.extract_strided_slice %1 {offsets = [134, 0], sizes = [1, 32], strides = [1, 1]} : vector<136x128xf32> to vector<1x32xf32>
    %17 = vector.extract_strided_slice %1 {offsets = [135, 0], sizes = [1, 32], strides = [1, 1]} : vector<136x128xf32> to vector<1x32xf32>
    %18 = arith.truncf %0 : vector<16x32xf32> to vector<16x32xbf16>
    %cst = arith.constant dense<0.000000e+00> : vector<16x96xf32>
    %19 = tpu.matmul %18, %3, %cst {dimension_numbers = #tpu.dot_dimension_numbers<[1], [0], [0], [1], [0, 0, 1, 1], [], []>} : vector<16x32xbf16>, vector<32x96xbf16>, vector<16x96xf32> -> vector<16x96xf32>
    %20 = vector.broadcast %10 : vector<1x96xf32> to vector<16x96xf32>
    %21 = arith.addf %19, %20 : vector<16x96xf32>
    %22 = vector.shape_cast %21 : vector<16x96xf32> to vector<2x8x96xf32>
    %23 = vector.extract_strided_slice %22 {offsets = [0, 0, 0], sizes = [2, 8, 16], strides = [1, 1, 1]} : vector<2x8x96xf32> to vector<2x8x16xf32>
    %24 = arith.truncf %23 : vector<2x8x16xf32> to vector<2x8x16xbf16>
    %25 = vector.extract_strided_slice %22 {offsets = [0, 0, 32], sizes = [2, 8, 16], strides = [1, 1, 1]} : vector<2x8x96xf32> to vector<2x8x16xf32>
    %26 = arith.truncf %25 : vector<2x8x16xf32> to vector<2x8x16xbf16>
    %27 = vector.extract_strided_slice %22 {offsets = [0, 0, 64], sizes = [2, 8, 16], strides = [1, 1, 1]} : vector<2x8x96xf32> to vector<2x8x16xf32>
    %28 = arith.truncf %27 : vector<2x8x16xf32> to vector<2x8x16xbf16>
    "tpu.trace_start"() <{level = 10 : i32, message = "bqd,bkd->bqk"}> : () -> ()
    %cst_3 = arith.constant dense<0.000000e+00> : vector<2x8x8xf32>
    %29 = tpu.matmul %24, %26, %cst_3 {dimension_numbers = #tpu.dot_dimension_numbers<[2], [2], [1], [1], [0, 0, 0, 1, 1, 1], [0], [0]>} : vector<2x8x16xbf16>, vector<2x8x16xbf16>, vector<2x8x8xf32> -> vector<2x8x8xf32>
    "tpu.trace_stop"() : () -> ()
    %cst_4 = arith.constant 2.500000e-01 : f32
    %30 = vector.broadcast %cst_4 : f32 to vector<2x8x8xf32>
    %31 = arith.mulf %29, %30 : vector<2x8x8xf32>
    %cst_5 = arith.constant dense<0xFF800000> : vector<2x8xf32>
    %32 = vector.multi_reduction <maximumf>, %31, %cst_5 [2] : vector<2x8x8xf32> to vector<2x8xf32>
    %33 = vector.shape_cast %32 : vector<2x8xf32> to vector<2x8x1xf32>
    %34 = vector.broadcast %33 : vector<2x8x1xf32> to vector<2x8x8xf32>
    %35 = arith.subf %31, %34 : vector<2x8x8xf32>
    %36 = math.exp %35 : vector<2x8x8xf32>
    %cst_6 = arith.constant dense<0.000000e+00> : vector<2x8xf32>
    %37 = vector.multi_reduction <add>, %36, %cst_6 [2] : vector<2x8x8xf32> to vector<2x8xf32>
    %38 = vector.shape_cast %37 : vector<2x8xf32> to vector<2x8x1xf32>
    %39 = vector.broadcast %38 : vector<2x8x1xf32> to vector<2x8x8xf32>
    %40 = arith.divf %36, %39 : vector<2x8x8xf32>
    %41 = arith.truncf %40 : vector<2x8x8xf32> to vector<2x8x8xbf16>
    "tpu.trace_start"() <{level = 10 : i32, message = "bqk,bkd->bqd"}> : () -> ()
    %cst_7 = arith.constant dense<0.000000e+00> : vector<2x8x16xf32>
    %42 = tpu.matmul %41, %28, %cst_7 {dimension_numbers = #tpu.dot_dimension_numbers<[2], [1], [1], [2], [0, 0, 0, 1, 1, 2], [0], [0]>} : vector<2x8x8xbf16>, vector<2x8x16xbf16>, vector<2x8x16xf32> -> vector<2x8x16xf32>
    "tpu.trace_stop"() : () -> ()
    %43 = vector.shape_cast %42 : vector<2x8x16xf32> to vector<16x16xf32>
    %44 = arith.truncf %43 : vector<16x16xf32> to vector<16x16xbf16>
    %45 = vector.extract_strided_slice %5 {offsets = [0, 0], sizes = [16, 32], strides = [1, 1]} : vector<32x32xbf16> to vector<16x32xbf16>
    %cst_8 = arith.constant dense<0.000000e+00> : vector<16x32xf32>
    %46 = tpu.matmul %44, %45, %cst_8 {dimension_numbers = #tpu.dot_dimension_numbers<[1], [0], [0], [1], [0, 0, 1, 1], [], []>} : vector<16x16xbf16>, vector<16x32xbf16>, vector<16x32xf32> -> vector<16x32xf32>
    %47 = vector.extract_strided_slice %22 {offsets = [0, 0, 16], sizes = [2, 8, 16], strides = [1, 1, 1]} : vector<2x8x96xf32> to vector<2x8x16xf32>
    %48 = arith.truncf %47 : vector<2x8x16xf32> to vector<2x8x16xbf16>
    %49 = vector.extract_strided_slice %22 {offsets = [0, 0, 48], sizes = [2, 8, 16], strides = [1, 1, 1]} : vector<2x8x96xf32> to vector<2x8x16xf32>
    %50 = arith.truncf %49 : vector<2x8x16xf32> to vector<2x8x16xbf16>
    %51 = vector.extract_strided_slice %22 {offsets = [0, 0, 80], sizes = [2, 8, 16], strides = [1, 1, 1]} : vector<2x8x96xf32> to vector<2x8x16xf32>
    %52 = arith.truncf %51 : vector<2x8x16xf32> to vector<2x8x16xbf16>
    "tpu.trace_start"() <{level = 10 : i32, message = "bqd,bkd->bqk"}> : () -> ()
    %cst_9 = arith.constant dense<0.000000e+00> : vector<2x8x8xf32>
    %53 = tpu.matmul %48, %50, %cst_9 {dimension_numbers = #tpu.dot_dimension_numbers<[2], [2], [1], [1], [0, 0, 0, 1, 1, 1], [0], [0]>} : vector<2x8x16xbf16>, vector<2x8x16xbf16>, vector<2x8x8xf32> -> vector<2x8x8xf32>
    "tpu.trace_stop"() : () -> ()
    %cst_10 = arith.constant 2.500000e-01 : f32
    %54 = vector.broadcast %cst_10 : f32 to vector<2x8x8xf32>
    %55 = arith.mulf %53, %54 : vector<2x8x8xf32>
    %cst_11 = arith.constant dense<0xFF800000> : vector<2x8xf32>
    %56 = vector.multi_reduction <maximumf>, %55, %cst_11 [2] : vector<2x8x8xf32> to vector<2x8xf32>
    %57 = vector.shape_cast %56 : vector<2x8xf32> to vector<2x8x1xf32>
    %58 = vector.broadcast %57 : vector<2x8x1xf32> to vector<2x8x8xf32>
    %59 = arith.subf %55, %58 : vector<2x8x8xf32>
    %60 = math.exp %59 : vector<2x8x8xf32>
    %cst_12 = arith.constant dense<0.000000e+00> : vector<2x8xf32>
    %61 = vector.multi_reduction <add>, %60, %cst_12 [2] : vector<2x8x8xf32> to vector<2x8xf32>
    %62 = vector.shape_cast %61 : vector<2x8xf32> to vector<2x8x1xf32>
    %63 = vector.broadcast %62 : vector<2x8x1xf32> to vector<2x8x8xf32>
    %64 = arith.divf %60, %63 : vector<2x8x8xf32>
    %65 = arith.truncf %64 : vector<2x8x8xf32> to vector<2x8x8xbf16>
    "tpu.trace_start"() <{level = 10 : i32, message = "bqk,bkd->bqd"}> : () -> ()
    %cst_13 = arith.constant dense<0.000000e+00> : vector<2x8x16xf32>
    %66 = tpu.matmul %65, %52, %cst_13 {dimension_numbers = #tpu.dot_dimension_numbers<[2], [1], [1], [2], [0, 0, 0, 1, 1, 2], [0], [0]>} : vector<2x8x8xbf16>, vector<2x8x16xbf16>, vector<2x8x16xf32> -> vector<2x8x16xf32>
    "tpu.trace_stop"() : () -> ()
    %67 = vector.shape_cast %66 : vector<2x8x16xf32> to vector<16x16xf32>
    %68 = arith.truncf %67 : vector<16x16xf32> to vector<16x16xbf16>
    %69 = vector.extract_strided_slice %5 {offsets = [16, 0], sizes = [16, 32], strides = [1, 1]} : vector<32x32xbf16> to vector<16x32xbf16>
    %cst_14 = arith.constant dense<0.000000e+00> : vector<16x32xf32>
    %70 = tpu.matmul %68, %69, %cst_14 {dimension_numbers = #tpu.dot_dimension_numbers<[1], [0], [0], [1], [0, 0, 1, 1], [], []>} : vector<16x16xbf16>, vector<16x32xbf16>, vector<16x32xf32> -> vector<16x32xf32>
    %71 = arith.addf %46, %70 : vector<16x32xf32>
    %72 = vector.broadcast %12 : vector<1x32xf32> to vector<16x32xf32>
    %73 = arith.addf %71, %72 : vector<16x32xf32>
    %74 = arith.addf %0, %73 : vector<16x32xf32>
    %cst_15 = arith.constant dense<0.000000e+00> : vector<16xf32>
    %75 = vector.multi_reduction <add>, %74, %cst_15 [1] : vector<16x32xf32> to vector<16xf32>
    %76 = vector.shape_cast %75 : vector<16xf32> to vector<16x1xf32>
    %cst_16 = arith.constant 3.200000e+01 : f32
    %77 = vector.broadcast %cst_16 : f32 to vector<16x1xf32>
    %78 = arith.divf %76, %77 : vector<16x1xf32>
    %79 = vector.broadcast %78 : vector<16x1xf32> to vector<16x32xf32>
    %80 = arith.subf %74, %79 : vector<16x32xf32>
    %81 = arith.mulf %80, %80 : vector<16x32xf32>
    %cst_17 = arith.constant dense<0.000000e+00> : vector<16xf32>
    %82 = vector.multi_reduction <add>, %81, %cst_17 [1] : vector<16x32xf32> to vector<16xf32>
    %83 = vector.shape_cast %82 : vector<16xf32> to vector<16x1xf32>
    %cst_18 = arith.constant 3.200000e+01 : f32
    %84 = vector.broadcast %cst_18 : f32 to vector<16x1xf32>
    %85 = arith.divf %83, %84 : vector<16x1xf32>
    %86 = vector.broadcast %78 : vector<16x1xf32> to vector<16x32xf32>
    %87 = arith.subf %74, %86 : vector<16x32xf32>
    %cst_19 = arith.constant 9.99999974E-6 : f32
    %88 = vector.broadcast %cst_19 : f32 to vector<16x1xf32>
    %89 = arith.addf %85, %88 : vector<16x1xf32>
    %90 = math.rsqrt %89 : vector<16x1xf32>
    %91 = vector.broadcast %90 : vector<16x1xf32> to vector<16x32xf32>
    %92 = arith.mulf %87, %91 : vector<16x32xf32>
    %93 = vector.broadcast %13 : vector<1x32xf32> to vector<16x32xf32>
    %94 = arith.mulf %92, %93 : vector<16x32xf32>
    %95 = vector.broadcast %14 : vector<1x32xf32> to vector<16x32xf32>
    %96 = arith.addf %94, %95 : vector<16x32xf32>
    %97 = arith.truncf %96 : vector<16x32xf32> to vector<16x32xbf16>
    %cst_20 = arith.constant dense<0.000000e+00> : vector<16x64xf32>
    %98 = tpu.matmul %97, %7, %cst_20 {dimension_numbers = #tpu.dot_dimension_numbers<[1], [0], [0], [1], [0, 0, 1, 1], [], []>} : vector<16x32xbf16>, vector<32x64xbf16>, vector<16x64xf32> -> vector<16x64xf32>
    %99 = vector.broadcast %11 : vector<1x64xf32> to vector<16x64xf32>
    %100 = arith.addf %98, %99 : vector<16x64xf32>
    %cst_21 = arith.constant 0.000000e+00 : f32
    %101 = vector.broadcast %cst_21 : f32 to vector<16x64xf32>
    %102 = arith.maximumf %100, %101 : vector<16x64xf32>
    %103 = arith.truncf %102 : vector<16x64xf32> to vector<16x64xbf16>
    %cst_22 = arith.constant dense<0.000000e+00> : vector<16x32xf32>
    %104 = tpu.matmul %103, %9, %cst_22 {dimension_numbers = #tpu.dot_dimension_numbers<[1], [0], [0], [1], [0, 0, 1, 1], [], []>} : vector<16x64xbf16>, vector<64x32xbf16>, vector<16x32xf32> -> vector<16x32xf32>
    %105 = vector.broadcast %15 : vector<1x32xf32> to vector<16x32xf32>
    %106 = arith.addf %104, %105 : vector<16x32xf32>
    %107 = arith.addf %96, %106 : vector<16x32xf32>
    %cst_23 = arith.constant dense<0.000000e+00> : vector<16xf32>
    %108 = vector.multi_reduction <add>, %107, %cst_23 [1] : vector<16x32xf32> to vector<16xf32>
    %109 = vector.shape_cast %108 : vector<16xf32> to vector<16x1xf32>
    %cst_24 = arith.constant 3.200000e+01 : f32
    %110 = vector.broadcast %cst_24 : f32 to vector<16x1xf32>
    %111 = arith.divf %109, %110 : vector<16x1xf32>
    %112 = vector.broadcast %111 : vector<16x1xf32> to vector<16x32xf32>
    %113 = arith.subf %107, %112 : vector<16x32xf32>
    %114 = arith.mulf %113, %113 : vector<16x32xf32>
    %cst_25 = arith.constant dense<0.000000e+00> : vector<16xf32>
    %115 = vector.multi_reduction <add>, %114, %cst_25 [1] : vector<16x32xf32> to vector<16xf32>
    %116 = vector.shape_cast %115 : vector<16xf32> to vector<16x1xf32>
    %cst_26 = arith.constant 3.200000e+01 : f32
    %117 = vector.broadcast %cst_26 : f32 to vector<16x1xf32>
    %118 = arith.divf %116, %117 : vector<16x1xf32>
    %119 = vector.broadcast %111 : vector<16x1xf32> to vector<16x32xf32>
    %120 = arith.subf %107, %119 : vector<16x32xf32>
    %cst_27 = arith.constant 9.99999974E-6 : f32
    %121 = vector.broadcast %cst_27 : f32 to vector<16x1xf32>
    %122 = arith.addf %118, %121 : vector<16x1xf32>
    %123 = math.rsqrt %122 : vector<16x1xf32>
    %124 = vector.broadcast %123 : vector<16x1xf32> to vector<16x32xf32>
    %125 = arith.mulf %120, %124 : vector<16x32xf32>
    %126 = vector.broadcast %16 : vector<1x32xf32> to vector<16x32xf32>
    %127 = arith.mulf %125, %126 : vector<16x32xf32>
    %128 = vector.broadcast %17 : vector<1x32xf32> to vector<16x32xf32>
    %129 = arith.addf %127, %128 : vector<16x32xf32>
    %c0_28 = arith.constant 0 : index
    %c0_29 = arith.constant 0 : index
    %130 = vector.load %arg3[%c0_28, %c0_29] : memref<16x32xf32, #tpu.memory_space<vmem>>, vector<16x32xf32>
    tpu.vector_store %arg3[%c0_28, %c0_29], %129 {strides = array<i32>} : memref<16x32xf32, #tpu.memory_space<vmem>>, vector<16x32xf32>,
    return
  }
  func.func @transform_0(%arg0: i32) -> (i32, i32) {
    %c0_i32 = arith.constant 0 : i32
    %c0_i32_0 = arith.constant 0 : i32
    %c0_i32_1 = arith.constant 0 : i32
    return %c0_i32, %c0_i32_0 : i32, i32
  }
  func.func @transform_1(%arg0: i32) -> (i32, i32) {
    %c0_i32 = arith.constant 0 : i32
    %c0_i32_0 = arith.constant 0 : i32
    %c0_i32_1 = arith.constant 0 : i32
    return %c0_i32, %c0_i32_0 : i32, i32
  }
  func.func @transform_2(%arg0: i32) -> (i32, i32) {
    %c0_i32 = arith.constant 0 : i32
    %c0_i32_0 = arith.constant 0 : i32
    %c0_i32_1 = arith.constant 0 : i32
    return %c0_i32, %c0_i32_0 : i32, i32
  }
}

</mosaic_0001>

<llo_original>
// kernel: tpu_custom_call.1
$region0: #{tpu_custom_call.1}
  #allocation0 [shape = 'u32[]', space=smem, size = 0x4, offset = 0x4, fixed_abs, tag = 'smem constant byte address 0x4 - core index']
  #allocation1 [shape = 'u32[144,128]{1,0:T(1,128)}', space=vmem, size = 0x12000, scoped, tag = 'internal scratch']
  %s0 = inlined_call_operand.hbm [shape: f32[16,32], index: 0, kind: input, shape index: {}]
  %s1 = inlined_call_operand.hbm [shape: f32[136,128], index: 1, kind: input, shape index: {}]
  %s2 = inlined_call_operand.hbm [shape: f32[16,32], index: 2, kind: output, shape index: {}]
  %s3 = sld [smem:[#allocation0]]
  $region26: #{tpu_custom_call.1} parent=0
    _
  %s5 = ssub.s32 1, %s3
  %s6 = scalar_select 0, %s5, %s3
  $region1: #{tpu_custom_call.1} parent=0
    #allocation2 [shape = 'u8[8192]{0}', space=vmem, size = 0x2000, scoped, tag = 'input window, operand 0, single buffered']
    #allocation3 [shape = 's32[1]{0}', space=sflag, size = 0x4, scoped, tag = 'scoped memory for tpu_custom_call.1']
    #allocation4 [shape = 's32[1]{0}', space=sflag, size = 0x4, scoped, tag = 'scoped memory for tpu_custom_call.1']
    #allocation5 [shape = 'u8[69632]{0}', space=vmem, size = 0x11000, scoped, tag = 'input window, operand 1, single buffered']
    #allocation6 [shape = 's32[1]{0}', space=sflag, size = 0x4, scoped, tag = 'scoped memory for tpu_custom_call.1']
    #allocation7 [shape = 'u8[8192]{0}', space=vmem, size = 0x2000, scoped, tag = 'output window, operand 0, single buffered']
    %7 = vsyncpa [#allocation3], 0
    %8 = vsyncpa [#allocation6], 0
    %9 = vsyncpa [#allocation4], 0
    // Predicated region
    $region2: #{tpu_custom_call.1} parent=1 // pred_check
      _
    $region3: #{tpu_custom_call.1} parent=1 // pred_check_branch
      %11 = sbr.rel (0) target = $region5
    $region4: #{tpu_custom_call.1} parent=1 // pred_region
      %s13 = ssub.s32 256, 256
      %14 = vsyncadd [#allocation3], %s13
      %s15 = sshll.u32 [#allocation2], 4
      %s16 = int_to_ptr.vmem [resolvable:$true] %s15
      %21 = dma.hbm_to_vmem [thread:$0]  %s0, 256, %s16, [#allocation3], 128, 128, 8
    $region5: #{tpu_custom_call.1} parent=1 // pred_fallthru
      _
    // Predicated region
    $region6: #{tpu_custom_call.1} parent=1 // pred_check
      _
    $region7: #{tpu_custom_call.1} parent=1 // pred_check_branch
      %23 = sbr.rel (0) target = $region9
    $region8: #{tpu_custom_call.1} parent=1 // pred_region
      %s25 = ssub.s32 2176, 2176
      %26 = vsyncadd [#allocation6], %s25
      %s27 = sshll.u32 [#allocation5], 4
      %s28 = int_to_ptr.vmem [resolvable:$true] %s27
      %33 = dma.hbm_to_vmem [thread:$0]  %s1, 2176, %s28, [#allocation6], 128, 128, 8
    $region9: #{tpu_custom_call.1} parent=1 // pred_fallthru
      _
    // Predicated region
    $region10: #{tpu_custom_call.1} parent=1 // pred_check
      _
    $region11: #{tpu_custom_call.1} parent=1 // pred_check_branch
      %35 = sbr.rel (0) target = $region13
    $region12: #{tpu_custom_call.1} parent=1 // pred_region
      %36 = dma.done [#allocation3], 256
    $region13: #{tpu_custom_call.1} parent=1 // pred_fallthru
      _
    // Predicated region
    $region14: #{tpu_custom_call.1} parent=1 // pred_check
      _
    $region15: #{tpu_custom_call.1} parent=1 // pred_check_branch
      %38 = sbr.rel (0) target = $region17
    $region16: #{tpu_custom_call.1} parent=1 // pred_region
      %39 = dma.done [#allocation6], 2176
    $region17: #{tpu_custom_call.1} parent=1 // pred_fallthru
      _
    %v41 = vld [vmem:[#allocation2] sm:$0xff]
    %v42 = vld [vmem:[#allocation2 + $0x8] sm:$0xff]
    %v43 = vld [vmem:[#allocation5] sm:$0xff]
    %v44 = vld [vmem:[#allocation5 + $0x8] sm:$0xff]
    %v45 = vld [vmem:[#allocation5 + $0x10] sm:$0xff]
    %v46 = vld [vmem:[#allocation5 + $0x18] sm:$0xff]
    %v47 = vld [vmem:[#allocation5 + $0x20] sm:$0xff]
    %v48 = vld [vmem:[#allocation5 + $0x28] sm:$0xff]
    %v49 = vld [vmem:[#allocation5 + $0x30] sm:$0xff]
    %v50 = vld [vmem:[#allocation5 + $0x38] sm:$0xff]
    %v51 = vld [vmem:[#allocation5 + $0x40] sm:$0xff]
    %v52 = vld [vmem:[#allocation5 + $0x48] sm:$0xff]
    %v53 = vld [vmem:[#allocation5 + $0x50] sm:$0xff]
    %v54 = vld [vmem:[#allocation5 + $0x58] sm:$0xff]
    %v55 = vld [vmem:[#allocation5 + $0x60] sm:$0xff]
    %v56 = vld [vmem:[#allocation5 + $0x68] sm:$0xff]
    %v57 = vld [vmem:[#allocation5 + $0x70] sm:$0xff]
    %v58 = vld [vmem:[#allocation5 + $0x78] sm:$0xff]
    %v59 = vld [vmem:[#allocation5 + $0x80] sm:$0xff]
    %v60 = vpack.c.bf16 %v44, %v43
    %v61 = vpack.c.bf16 %v46, %v45
    %v62 = vpack.c.bf16 %v48, %v47
    %v63 = vpack.c.bf16 %v50, %v49
    %v64 = vpack.c.bf16 %v52, %v51
    %v65 = vpack.c.bf16 %v54, %v53
    %v66 = vpack.c.bf16 %v56, %v55
    %v67 = vpack.c.bf16 %v58, %v57
    %v68 = vpack.c.bf16 %v42, %v41
    %v69 = vlaneseq
    %v70 = vshrl.u32 %v69, 7
    %v71 = vsub.s32 0, %v70
    %v72 = vrot.slane %v59, %v71
    %vm73 = vcmask 261120
    %v75 = vsel %vm73, %v68, 0
    %77 = vmatprep.subr.bf16.mxu0 0
    %78 = vmatpush1.bf16.msra.mxu0 %v60
    %79 = vmatprep.subr.bf16.mxu0 0
    %80 = vmatpush1.bf16.msra.mxu0 %v61
    %81 = vmatprep.subr.bf16.mxu0 0
    %82 = vmatpush1.bf16.msra.mxu0 0
    %83 = vmatprep.subr.bf16.mxu0 0
    %84 = vmatpush1.bf16.msra.mxu0 0
    %85 = vmatprep.subr.bf16.mxu0 0
    %86 = vmatpush1.bf16.msra.mxu0 0
    %87 = vmatprep.subr.bf16.mxu0 0
    %88 = vmatpush1.bf16.msra.mxu0 0
    %89 = vmatprep.subr.bf16.mxu0 0
    %90 = vmatpush1.bf16.msra.mxu0 0
    %91 = vmatprep.subr.bf16.mxu0 0
    %92 = vmatpush1.bf16.msra.mxu0 0
    %93 = vmatprep.subr.bf16.mxu0 0
    %94 = vmatpush1.bf16.msra.mxu0 0
    %95 = vmatprep.subr.bf16.mxu0 0
    %96 = vmatpush1.bf16.msra.mxu0 0
    %97 = vmatprep.subr.bf16.mxu0 0
    %98 = vmatpush1.bf16.msra.mxu0 0
    %99 = vmatprep.subr.bf16.mxu0 0
    %100 = vmatpush1.bf16.msra.mxu0 0
    %101 = vmatprep.subr.bf16.mxu0 0
    %102 = vmatpush1.bf16.msra.mxu0 0
    %103 = vmatprep.subr.bf16.mxu0 0
    %104 = vmatpush1.bf16.msra.mxu0 0
    %105 = vmatprep.subr.bf16.mxu0 0
    %106 = vmatpush1.bf16.msra.mxu0 0
    %107 = vmatprep.subr.bf16.mxu0 0
    %108 = vmatpush1.bf16.msra.mxu0 0
    %109 = vmatprep.mubr.bf16.mxu0 0
    %110 = vmatmul.mubr.bf16.gmra.mrb[0].mxu0 %v75
    %v111 = vpop.f32.mrb[0].mxu0
    %v112 = vadd.f32 %v72, %v111
    %v113 = vpop.f32.mrb[0].mxu0
    %v114 = vpop.f32.mrb[0].mxu0
    %v115 = vadd.f32 %v72, %v114
    %v116 = vpop.f32.mrb[0].mxu0
    %117 = vdwg.mxu0
    %v118 = vpack.c.bf16 %v112, %v112
    %v119 = vpack.c.bf16 %v115, %v115
    %121 = vrot.lane.b32.xlu0 %v118, 96
    %v122 = vpop.permute.xlu0 %121
    %vm123 = vcmask 130048
    %v125 = vsel %vm123, %v118, 0
    %v128 = vsel %vm123, %v122, 0
    %130 = vmatprep.subr.bf16.mxu0 0
    %131 = vmatpush1.bf16.xpose.msra.mxu0 %v128
    %132 = vmatprep.subr.bf16.mxu0 0
    %133 = vmatpush1.bf16.xpose.msra.mxu0 0
    %134 = vmatprep.subr.bf16.mxu0 0
    %135 = vmatpush1.bf16.xpose.msra.mxu0 0
    %136 = vmatprep.subr.bf16.mxu0 0
    %137 = vmatpush1.bf16.xpose.msra.mxu0 0
    %138 = vmatprep.subr.bf16.mxu0 0
    %139 = vmatpush1.bf16.xpose.msra.mxu0 0
    %140 = vmatprep.subr.bf16.mxu0 0
    %141 = vmatpush1.bf16.xpose.msra.mxu0 0
    %142 = vmatprep.subr.bf16.mxu0 0
    %143 = vmatpush1.bf16.xpose.msra.mxu0 0
    %144 = vmatprep.subr.bf16.mxu0 0
    %145 = vmatpush1.bf16.xpose.msra.mxu0 0
    %146 = vmatprep.subr.bf16.mxu0 0
    %147 = vmatpush1.bf16.xpose.msra.mxu0 0
    %148 = vmatprep.subr.bf16.mxu0 0
    %149 = vmatpush1.bf16.xpose.msra.mxu0 0
    %150 = vmatprep.subr.bf16.mxu0 0
    %151 = vmatpush1.bf16.xpose.msra.mxu0 0
    %152 = vmatprep.subr.bf16.mxu0 0
    %153 = vmatpush1.bf16.xpose.msra.mxu0 0
    %154 = vmatprep.subr.bf16.mxu0 0
    %155 = vmatpush1.bf16.xpose.msra.mxu0 0
    %156 = vmatprep.subr.bf16.mxu0 0
    %157 = vmatpush1.bf16.xpose.msra.mxu0 0
    %158 = vmatprep.subr.bf16.mxu0 0
    %159 = vmatpush1.bf16.xpose.msra.mxu0 0
    %160 = vmatprep.subr.bf16.mxu0 0
    %161 = vmatpush1.bf16.xpose.msra.mxu0 0
    %162 = vmatprep.mubr.bf16.mxu0 0
    %163 = vmatmul.mubr.bf16.gmra.mrb[0].mxu0 %v125
    %v164 = vpop.f32.mrb[0].mxu0
    %v165 = vadd.f32 0.0, %v164
    %v166 = vpop.f32.mrb[0].mxu0
    %v167 = vpop.f32.mrb[0].mxu0
    %v168 = vpop.f32.mrb[0].mxu0
    %169 = vdwg.mxu0
    %171 = vrot.lane.b32.xlu0 %v119, 96
    %v172 = vpop.permute.xlu0 %171
    %v174 = vsel %vm123, %v119, 0
    %v177 = vsel %vm123, %v172, 0
    %179 = vmatprep.subr.bf16.mxu0 0
    %180 = vmatpush1.bf16.xpose.msra.mxu0 %v177
    %181 = vmatprep.subr.bf16.mxu0 0
    %182 = vmatpush1.bf16.xpose.msra.mxu0 0
    %183 = vmatprep.subr.bf16.mxu0 0
    %184 = vmatpush1.bf16.xpose.msra.mxu0 0
    %185 = vmatprep.subr.bf16.mxu0 0
    %186 = vmatpush1.bf16.xpose.msra.mxu0 0
    %187 = vmatprep.subr.bf16.mxu0 0
    %188 = vmatpush1.bf16.xpose.msra.mxu0 0
    %189 = vmatprep.subr.bf16.mxu0 0
    %190 = vmatpush1.bf16.xpose.msra.mxu0 0
    %191 = vmatprep.subr.bf16.mxu0 0
    %192 = vmatpush1.bf16.xpose.msra.mxu0 0
    %193 = vmatprep.subr.bf16.mxu0 0
    %194 = vmatpush1.bf16.xpose.msra.mxu0 0
    %195 = vmatprep.subr.bf16.mxu0 0
    %196 = vmatpush1.bf16.xpose.msra.mxu0 0
    %197 = vmatprep.subr.bf16.mxu0 0
    %198 = vmatpush1.bf16.xpose.msra.mxu0 0
    %199 = vmatprep.subr.bf16.mxu0 0
    %200 = vmatpush1.bf16.xpose.msra.mxu0 0
    %201 = vmatprep.subr.bf16.mxu0 0
    %202 = vmatpush1.bf16.xpose.msra.mxu0 0
    %203 = vmatprep.subr.bf16.mxu0 0
    %204 = vmatpush1.bf16.xpose.msra.mxu0 0
    %205 = vmatprep.subr.bf16.mxu0 0
    %206 = vmatpush1.bf16.xpose.msra.mxu0 0
    %207 = vmatprep.subr.bf16.mxu0 0
    %208 = vmatpush1.bf16.xpose.msra.mxu0 0
    %209 = vmatprep.subr.bf16.mxu0 0
    %210 = vmatpush1.bf16.xpose.msra.mxu0 0
    %211 = vmatprep.mubr.bf16.mxu0 0
    %212 = vmatmul.mubr.bf16.gmra.mrb[0].mxu0 %v174
    %v213 = vpop.f32.mrb[0].mxu0
    %v214 = vadd.f32 0.0, %v213
    %v215 = vpop.f32.mrb[0].mxu0
    %v216 = vpop.f32.mrb[0].mxu0
    %v217 = vpop.f32.mrb[0].mxu0
    %218 = vdwg.mxu0
    %v219 = vmul.f32 %v165, 0.25
    %v220 = vmul.f32 %v214, 0.25
    %vm221 = vcmask 64512
    %v222 = vsel %vm221, %v219, -inf
    %223 = vmax.xlane.f32.xlu0 %v222
    %v224 = vpop.xlane.xlu0 %223
    %v225 = vsel %vm221, %v220, -inf
    %226 = vmax.xlane.f32.xlu0 %v225
    %v227 = vpop.xlane.xlu0 %226
    %v228 = vsub.f32 %v219, %v224
    %v229 = vsub.f32 %v220, %v227
    %v230 = vmul.f32 %v228, 1.442695
    %v231 = vpow.pop %v230
    %v232 = vmul.f32 %v229, 1.442695
    %v233 = vpow.pop %v232
    %v234 = vsel %vm221, %v231, 0.0
    %235 = vadd.xlane.f32.xlu0 %v234
    %v236 = vpop.xlane.xlu0 %235
    %v237 = vsel %vm221, %v233, 0.0
    %238 = vadd.xlane.f32.xlu0 %v237
    %v239 = vpop.xlane.xlu0 %238
    %v240 = vrcp.pop %v236
    %v241 = vmul.f32 %v231, %v240
    %v242 = vrcp.pop %v239
    %v243 = vmul.f32 %v233, %v242
    %v244 = vpack.c.bf16 %v241, %v241
    %v245 = vpack.c.bf16 %v243, %v243
    %246 = vrot.lane.b32.xlu0 %v118, 64
    %v247 = vpop.permute.xlu0 %246
    %v249 = vsel %vm221, %v244, 0
    %vm251 = vcmask 1043456
    %v253 = vsel %vm251, %v247, 0
    %255 = vmatprep.subr.bf16.mxu0 0
    %256 = vmatpush1.bf16.msra.mxu0 %v253
    %257 = vmatprep.subr.bf16.mxu0 0
    %258 = vmatpush1.bf16.msra.mxu0 0
    %259 = vmatprep.subr.bf16.mxu0 0
    %260 = vmatpush1.bf16.msra.mxu0 0
    %261 = vmatprep.subr.bf16.mxu0 0
    %262 = vmatpush1.bf16.msra.mxu0 0
    %263 = vmatprep.subr.bf16.mxu0 0
    %264 = vmatpush1.bf16.msra.mxu0 0
    %265 = vmatprep.subr.bf16.mxu0 0
    %266 = vmatpush1.bf16.msra.mxu0 0
    %267 = vmatprep.subr.bf16.mxu0 0
    %268 = vmatpush1.bf16.msra.mxu0 0
    %269 = vmatprep.subr.bf16.mxu0 0
    %270 = vmatpush1.bf16.msra.mxu0 0
    %271 = vmatprep.subr.bf16.mxu0 0
    %272 = vmatpush1.bf16.msra.mxu0 0
    %273 = vmatprep.subr.bf16.mxu0 0
    %274 = vmatpush1.bf16.msra.mxu0 0
    %275 = vmatprep.subr.bf16.mxu0 0
    %276 = vmatpush1.bf16.msra.mxu0 0
    %277 = vmatprep.subr.bf16.mxu0 0
    %278 = vmatpush1.bf16.msra.mxu0 0
    %279 = vmatprep.subr.bf16.mxu0 0
    %280 = vmatpush1.bf16.msra.mxu0 0
    %281 = vmatprep.subr.bf16.mxu0 0
    %282 = vmatpush1.bf16.msra.mxu0 0
    %283 = vmatprep.subr.bf16.mxu0 0
    %284 = vmatpush1.bf16.msra.mxu0 0
    %285 = vmatprep.subr.bf16.mxu0 0
    %286 = vmatpush1.bf16.msra.mxu0 0
    %287 = vmatprep.mubr.bf16.mxu0 0
    %288 = vmatmul.mubr.bf16.gmra.mrb[0].mxu0 %v249
    %v289 = vpop.f32.mrb[0].mxu0
    %v290 = vadd.f32 0.0, %v289
    %v291 = vpop.f32.mrb[0].mxu0
    %v292 = vpop.f32.mrb[0].mxu0
    %v293 = vpop.f32.mrb[0].mxu0
    %294 = vdwg.mxu0
    %295 = vrot.lane.b32.xlu0 %v119, 64
    %v296 = vpop.permute.xlu0 %295
    %v298 = vsel %vm221, %v245, 0
    %v301 = vsel %vm251, %v296, 0
    %303 = vmatprep.subr.bf16.mxu0 0
    %304 = vmatpush1.bf16.msra.mxu0 %v301
    %305 = vmatprep.subr.bf16.mxu0 0
    %306 = vmatpush1.bf16.msra.mxu0 0
    %307 = vmatprep.subr.bf16.mxu0 0
    %308 = vmatpush1.bf16.msra.mxu0 0
    %309 = vmatprep.subr.bf16.mxu0 0
    %310 = vmatpush1.bf16.msra.mxu0 0
    %311 = vmatprep.subr.bf16.mxu0 0
    %312 = vmatpush1.bf16.msra.mxu0 0
    %313 = vmatprep.subr.bf16.mxu0 0
    %314 = vmatpush1.bf16.msra.mxu0 0
    %315 = vmatprep.subr.bf16.mxu0 0
    %316 = vmatpush1.bf16.msra.mxu0 0
    %317 = vmatprep.subr.bf16.mxu0 0
    %318 = vmatpush1.bf16.msra.mxu0 0
    %319 = vmatprep.subr.bf16.mxu0 0
    %320 = vmatpush1.bf16.msra.mxu0 0
    %321 = vmatprep.subr.bf16.mxu0 0
    %322 = vmatpush1.bf16.msra.mxu0 0
    %323 = vmatprep.subr.bf16.mxu0 0
    %324 = vmatpush1.bf16.msra.mxu0 0
    %325 = vmatprep.subr.bf16.mxu0 0
    %326 = vmatpush1.bf16.msra.mxu0 0
    %327 = vmatprep.subr.bf16.mxu0 0
    %328 = vmatpush1.bf16.msra.mxu0 0
    %329 = vmatprep.subr.bf16.mxu0 0
    %330 = vmatpush1.bf16.msra.mxu0 0
    %331 = vmatprep.subr.bf16.mxu0 0
    %332 = vmatpush1.bf16.msra.mxu0 0
    %333 = vmatprep.subr.bf16.mxu0 0
    %334 = vmatpush1.bf16.msra.mxu0 0
    %335 = vmatprep.mubr.bf16.mxu0 0
    %336 = vmatmul.mubr.bf16.gmra.mrb[0].mxu0 %v298
    %v337 = vpop.f32.mrb[0].mxu0
    %v338 = vadd.f32 0.0, %v337
    %v339 = vpop.f32.mrb[0].mxu0
    %v340 = vpop.f32.mrb[0].mxu0
    %v341 = vpop.f32.mrb[0].mxu0
    %342 = vdwg.mxu0
    %v343 = vpack.c.bf16 %v338, %v290
    %344 = vrot.lane.b32.xlu0 %v118, 112
    %v345 = vpop.permute.xlu0 %344
    %346 = vrot.lane.b32.xlu0 %v118, 80
    %v347 = vpop.permute.xlu0 %346
    %v349 = vsel %vm123, %v345, 0
    %v352 = vsel %vm123, %v347, 0
    %354 = vmatprep.subr.bf16.mxu0 0
    %355 = vmatpush1.bf16.xpose.msra.mxu0 %v352
    %356 = vmatprep.subr.bf16.mxu0 0
    %357 = vmatpush1.bf16.xpose.msra.mxu0 0
    %358 = vmatprep.subr.bf16.mxu0 0
    %359 = vmatpush1.bf16.xpose.msra.mxu0 0
    %360 = vmatprep.subr.bf16.mxu0 0
    %361 = vmatpush1.bf16.xpose.msra.mxu0 0
    %362 = vmatprep.subr.bf16.mxu0 0
    %363 = vmatpush1.bf16.xpose.msra.mxu0 0
    %364 = vmatprep.subr.bf16.mxu0 0
    %365 = vmatpush1.bf16.xpose.msra.mxu0 0
    %366 = vmatprep.subr.bf16.mxu0 0
    %367 = vmatpush1.bf16.xpose.msra.mxu0 0
    %368 = vmatprep.subr.bf16.mxu0 0
    %369 = vmatpush1.bf16.xpose.msra.mxu0 0
    %370 = vmatprep.subr.bf16.mxu0 0
    %371 = vmatpush1.bf16.xpose.msra.mxu0 0
    %372 = vmatprep.subr.bf16.mxu0 0
    %373 = vmatpush1.bf16.xpose.msra.mxu0 0
    %374 = vmatprep.subr.bf16.mxu0 0
    %375 = vmatpush1.bf16.xpose.msra.mxu0 0
    %376 = vmatprep.subr.bf16.mxu0 0
    %377 = vmatpush1.bf16.xpose.msra.mxu0 0
    %378 = vmatprep.subr.bf16.mxu0 0
    %379 = vmatpush1.bf16.xpose.msra.mxu0 0
    %380 = vmatprep.subr.bf16.mxu0 0
    %381 = vmatpush1.bf16.xpose.msra.mxu0 0
    %382 = vmatprep.subr.bf16.mxu0 0
    %383 = vmatpush1.bf16.xpose.msra.mxu0 0
    %384 = vmatprep.subr.bf16.mxu0 0
    %385 = vmatpush1.bf16.xpose.msra.mxu0 0
    %386 = vmatprep.mubr.bf16.mxu0 0
    %387 = vmatmul.mubr.bf16.gmra.mrb[0].mxu0 %v349
    %v388 = vpop.f32.mrb[0].mxu0
    %v389 = vadd.f32 0.0, %v388
    %v390 = vpop.f32.mrb[0].mxu0
    %v391 = vpop.f32.mrb[0].mxu0
    %v392 = vpop.f32.mrb[0].mxu0
    %393 = vdwg.mxu0
    %394 = vrot.lane.b32.xlu0 %v119, 112
    %v395 = vpop.permute.xlu0 %394
    %396 = vrot.lane.b32.xlu0 %v119, 80
    %v397 = vpop.permute.xlu0 %396
    %v399 = vsel %vm123, %v395, 0
    %v402 = vsel %vm123, %v397, 0
    %404 = vmatprep.subr.bf16.mxu0 0
    %405 = vmatpush1.bf16.xpose.msra.mxu0 %v402
    %406 = vmatprep.subr.bf16.mxu0 0
    %407 = vmatpush1.bf16.xpose.msra.mxu0 0
    %408 = vmatprep.subr.bf16.mxu0 0
    %409 = vmatpush1.bf16.xpose.msra.mxu0 0
    %410 = vmatprep.subr.bf16.mxu0 0
    %411 = vmatpush1.bf16.xpose.msra.mxu0 0
    %412 = vmatprep.subr.bf16.mxu0 0
    %413 = vmatpush1.bf16.xpose.msra.mxu0 0
    %414 = vmatprep.subr.bf16.mxu0 0
    %415 = vmatpush1.bf16.xpose.msra.mxu0 0
    %416 = vmatprep.subr.bf16.mxu0 0
    %417 = vmatpush1.bf16.xpose.msra.mxu0 0
    %418 = vmatprep.subr.bf16.mxu0 0
    %419 = vmatpush1.bf16.xpose.msra.mxu0 0
    %420 = vmatprep.subr.bf16.mxu0 0
    %421 = vmatpush1.bf16.xpose.msra.mxu0 0
    %422 = vmatprep.subr.bf16.mxu0 0
    %423 = vmatpush1.bf16.xpose.msra.mxu0 0
    %424 = vmatprep.subr.bf16.mxu0 0
    %425 = vmatpush1.bf16.xpose.msra.mxu0 0
    %426 = vmatprep.subr.bf16.mxu0 0
    %427 = vmatpush1.bf16.xpose.msra.mxu0 0
    %428 = vmatprep.subr.bf16.mxu0 0
    %429 = vmatpush1.bf16.xpose.msra.mxu0 0
    %430 = vmatprep.subr.bf16.mxu0 0
    %431 = vmatpush1.bf16.xpose.msra.mxu0 0
    %432 = vmatprep.subr.bf16.mxu0 0
    %433 = vmatpush1.bf16.xpose.msra.mxu0 0
    %434 = vmatprep.subr.bf16.mxu0 0
    %435 = vmatpush1.bf16.xpose.msra.mxu0 0
    %436 = vmatprep.mubr.bf16.mxu0 0
    %437 = vmatmul.mubr.bf16.gmra.mrb[0].mxu0 %v399
    %v438 = vpop.f32.mrb[0].mxu0
    %v439 = vadd.f32 0.0, %v438
    %v440 = vpop.f32.mrb[0].mxu0
    %v441 = vpop.f32.mrb[0].mxu0
    %v442 = vpop.f32.mrb[0].mxu0
    %443 = vdwg.mxu0
    %v444 = vmul.f32 %v389, 0.25
    %v445 = vmul.f32 %v439, 0.25
    %v446 = vsel %vm221, %v444, -inf
    %447 = vmax.xlane.f32.xlu0 %v446
    %v448 = vpop.xlane.xlu0 %447
    %v449 = vsel %vm221, %v445, -inf
    %450 = vmax.xlane.f32.xlu0 %v449
    %v451 = vpop.xlane.xlu0 %450
    %v452 = vsub.f32 %v444, %v448
    %v453 = vsub.f32 %v445, %v451
    %v454 = vmul.f32 %v452, 1.442695
    %v455 = vpow.pop %v454
    %v456 = vmul.f32 %v453, 1.442695
    %v457 = vpow.pop %v456
    %v458 = vsel %vm221, %v455, 0.0
    %459 = vadd.xlane.f32.xlu0 %v458
    %v460 = vpop.xlane.xlu0 %459
    %v461 = vsel %vm221, %v457, 0.0
    %462 = vadd.xlane.f32.xlu0 %v461
    %v463 = vpop.xlane.xlu0 %462
    %v464 = vrcp.pop %v460
    %v465 = vmul.f32 %v455, %v464
    %v466 = vrcp.pop %v463
    %v467 = vmul.f32 %v457, %v466
    %v468 = vpack.c.bf16 %v465, %v465
    %v469 = vpack.c.bf16 %v467, %v467
    %470 = vrot.lane.b32.xlu0 %v118, 48
    %v471 = vpop.permute.xlu0 %470
    %v473 = vsel %vm221, %v468, 0
    %v476 = vsel %vm251, %v471, 0
    %478 = vmatprep.subr.bf16.mxu0 0
    %479 = vmatpush1.bf16.msra.mxu0 %v476
    %480 = vmatprep.subr.bf16.mxu0 0
    %481 = vmatpush1.bf16.msra.mxu0 0
    %482 = vmatprep.subr.bf16.mxu0 0
    %483 = vmatpush1.bf16.msra.mxu0 0
    %484 = vmatprep.subr.bf16.mxu0 0
    %485 = vmatpush1.bf16.msra.mxu0 0
    %486 = vmatprep.subr.bf16.mxu0 0
    %487 = vmatpush1.bf16.msra.mxu0 0
    %488 = vmatprep.subr.bf16.mxu0 0
    %489 = vmatpush1.bf16.msra.mxu0 0
    %490 = vmatprep.subr.bf16.mxu0 0
    %491 = vmatpush1.bf16.msra.mxu0 0
    %492 = vmatprep.subr.bf16.mxu0 0
    %493 = vmatpush1.bf16.msra.mxu0 0
    %494 = vmatprep.subr.bf16.mxu0 0
    %495 = vmatpush1.bf16.msra.mxu0 0
    %496 = vmatprep.subr.bf16.mxu0 0
    %497 = vmatpush1.bf16.msra.mxu0 0
    %498 = vmatprep.subr.bf16.mxu0 0
    %499 = vmatpush1.bf16.msra.mxu0 0
    %500 = vmatprep.subr.bf16.mxu0 0
    %501 = vmatpush1.bf16.msra.mxu0 0
    %502 = vmatprep.subr.bf16.mxu0 0
    %503 = vmatpush1.bf16.msra.mxu0 0
    %504 = vmatprep.subr.bf16.mxu0 0
    %505 = vmatpush1.bf16.msra.mxu0 0
    %506 = vmatprep.subr.bf16.mxu0 0
    %507 = vmatpush1.bf16.msra.mxu0 0
    %508 = vmatprep.subr.bf16.mxu0 0
    %509 = vmatpush1.bf16.msra.mxu0 0
    %510 = vmatprep.mubr.bf16.mxu0 0
    %511 = vmatmul.mubr.bf16.gmra.mrb[0].mxu0 %v473
    %v512 = vpop.f32.mrb[0].mxu0
    %v513 = vadd.f32 0.0, %v512
    %v514 = vpop.f32.mrb[0].mxu0
    %v515 = vpop.f32.mrb[0].mxu0
    %v516 = vpop.f32.mrb[0].mxu0
    %517 = vdwg.mxu0
    %518 = vrot.lane.b32.xlu0 %v119, 48
    %v519 = vpop.permute.xlu0 %518
    %v521 = vsel %vm221, %v469, 0
    %v524 = vsel %vm251, %v519, 0
    %526 = vmatprep.subr.bf16.mxu0 0
    %527 = vmatpush1.bf16.msra.mxu0 %v524
    %528 = vmatprep.subr.bf16.mxu0 0
    %529 = vmatpush1.bf16.msra.mxu0 0
    %530 = vmatprep.subr.bf16.mxu0 0
    %531 = vmatpush1.bf16.msra.mxu0 0
    %532 = vmatprep.subr.bf16.mxu0 0
    %533 = vmatpush1.bf16.msra.mxu0 0
    %534 = vmatprep.subr.bf16.mxu0 0
    %535 = vmatpush1.bf16.msra.mxu0 0
    %536 = vmatprep.subr.bf16.mxu0 0
    %537 = vmatpush1.bf16.msra.mxu0 0
    %538 = vmatprep.subr.bf16.mxu0 0
    %539 = vmatpush1.bf16.msra.mxu0 0
    %540 = vmatprep.subr.bf16.mxu0 0
    %541 = vmatpush1.bf16.msra.mxu0 0
    %542 = vmatprep.subr.bf16.mxu0 0
    %543 = vmatpush1.bf16.msra.mxu0 0
    %544 = vmatprep.subr.bf16.mxu0 0
    %545 = vmatpush1.bf16.msra.mxu0 0
    %546 = vmatprep.subr.bf16.mxu0 0
    %547 = vmatpush1.bf16.msra.mxu0 0
    %548 = vmatprep.subr.bf16.mxu0 0
    %549 = vmatpush1.bf16.msra.mxu0 0
    %550 = vmatprep.subr.bf16.mxu0 0
    %551 = vmatpush1.bf16.msra.mxu0 0
    %552 = vmatprep.subr.bf16.mxu0 0
    %553 = vmatpush1.bf16.msra.mxu0 0
    %554 = vmatprep.subr.bf16.mxu0 0
    %555 = vmatpush1.bf16.msra.mxu0 0
    %556 = vmatprep.subr.bf16.mxu0 0
    %557 = vmatpush1.bf16.msra.mxu0 0
    %558 = vmatprep.mubr.bf16.mxu0 0
    %559 = vmatmul.mubr.bf16.gmra.mrb[0].mxu0 %v521
    %v560 = vpop.f32.mrb[0].mxu0
    %v561 = vadd.f32 0.0, %v560
    %v562 = vpop.f32.mrb[0].mxu0
    %v563 = vpop.f32.mrb[0].mxu0
    %v564 = vpop.f32.mrb[0].mxu0
    %565 = vdwg.mxu0
    %v566 = vpack.c.bf16 %v561, %v513
    %568 = vrot.lane.b32.xlu0 %v61, 32
    %v569 = vpop.permute.xlu0 %568
    %v572 = vsel %vm123, %v566, 0
    %574 = vmatprep.subr.bf16.mxu0 0
    %575 = vmatpush1.bf16.msra.mxu0 %v569
    %576 = vmatprep.subr.bf16.mxu0 0
    %577 = vmatpush1.bf16.msra.mxu0 0
    %578 = vmatprep.subr.bf16.mxu0 0
    %579 = vmatpush1.bf16.msra.mxu0 0
    %580 = vmatprep.subr.bf16.mxu0 0
    %581 = vmatpush1.bf16.msra.mxu0 0
    %582 = vmatprep.subr.bf16.mxu0 0
    %583 = vmatpush1.bf16.msra.mxu0 0
    %584 = vmatprep.subr.bf16.mxu0 0
    %585 = vmatpush1.bf16.msra.mxu0 0
    %586 = vmatprep.subr.bf16.mxu0 0
    %587 = vmatpush1.bf16.msra.mxu0 0
    %588 = vmatprep.subr.bf16.mxu0 0
    %589 = vmatpush1.bf16.msra.mxu0 0
    %590 = vmatprep.subr.bf16.mxu0 0
    %591 = vmatpush1.bf16.msra.mxu0 0
    %592 = vmatprep.subr.bf16.mxu0 0
    %593 = vmatpush1.bf16.msra.mxu0 0
    %594 = vmatprep.subr.bf16.mxu0 0
    %595 = vmatpush1.bf16.msra.mxu0 0
    %596 = vmatprep.subr.bf16.mxu0 0
    %597 = vmatpush1.bf16.msra.mxu0 0
    %598 = vmatprep.subr.bf16.mxu0 0
    %599 = vmatpush1.bf16.msra.mxu0 0
    %600 = vmatprep.subr.bf16.mxu0 0
    %601 = vmatpush1.bf16.msra.mxu0 0
    %602 = vmatprep.subr.bf16.mxu0 0
    %603 = vmatpush1.bf16.msra.mxu0 0
    %604 = vmatprep.subr.bf16.mxu0 0
    %605 = vmatpush1.bf16.msra.mxu0 0
    %606 = vmatprep.mubr.bf16.mxu0 0
    %607 = vmatmul.mubr.bf16.gmra.mrb[0].mxu0 %v572
    %v608 = vpop.f32.mrb[0].mxu0
    %v609 = vadd.f32 0.0, %v608
    %v610 = vpop.f32.mrb[0].mxu0
    %v611 = vpop.f32.mrb[0].mxu0
    %v612 = vadd.f32 0.0, %v611
    %v613 = vpop.f32.mrb[0].mxu0
    %614 = vdwg.mxu0
    %616 = vrot.lane.b32.xlu0 %v60, 32
    %v617 = vpop.permute.xlu0 %616
    %v620 = vsel %vm123, %v343, 0
    %622 = vmatprep.subr.bf16.mxu0 0
    %623 = vmatpush1.bf16.msra.mxu0 %v617
    %624 = vmatprep.subr.bf16.mxu0 0
    %625 = vmatpush1.bf16.msra.mxu0 0
    %626 = vmatprep.subr.bf16.mxu0 0
    %627 = vmatpush1.bf16.msra.mxu0 0
    %628 = vmatprep.subr.bf16.mxu0 0
    %629 = vmatpush1.bf16.msra.mxu0 0
    %630 = vmatprep.subr.bf16.mxu0 0
    %631 = vmatpush1.bf16.msra.mxu0 0
    %632 = vmatprep.subr.bf16.mxu0 0
    %633 = vmatpush1.bf16.msra.mxu0 0
    %634 = vmatprep.subr.bf16.mxu0 0
    %635 = vmatpush1.bf16.msra.mxu0 0
    %636 = vmatprep.subr.bf16.mxu0 0
    %637 = vmatpush1.bf16.msra.mxu0 0
    %638 = vmatprep.subr.bf16.mxu0 0
    %639 = vmatpush1.bf16.msra.mxu0 0
    %640 = vmatprep.subr.bf16.mxu0 0
    %641 = vmatpush1.bf16.msra.mxu0 0
    %642 = vmatprep.subr.bf16.mxu0 0
    %643 = vmatpush1.bf16.msra.mxu0 0
    %644 = vmatprep.subr.bf16.mxu0 0
    %645 = vmatpush1.bf16.msra.mxu0 0
    %646 = vmatprep.subr.bf16.mxu0 0
    %647 = vmatpush1.bf16.msra.mxu0 0
    %648 = vmatprep.subr.bf16.mxu0 0
    %649 = vmatpush1.bf16.msra.mxu0 0
    %650 = vmatprep.subr.bf16.mxu0 0
    %651 = vmatpush1.bf16.msra.mxu0 0
    %652 = vmatprep.subr.bf16.mxu0 0
    %653 = vmatpush1.bf16.msra.mxu0 0
    %654 = vmatprep.mubr.bf16.mxu0 0
    %655 = vmatmul.mubr.bf16.gmra.mrb[0].mxu0 %v620
    %v656 = vpop.f32.mrb[0].mxu0
    %v657 = vadd.f32 %v609, %v656
    %v658 = vpop.f32.mrb[0].mxu0
    %v659 = vpop.f32.mrb[0].mxu0
    %v660 = vadd.f32 %v612, %v659
    %v661 = vpop.f32.mrb[0].mxu0
    %662 = vdwg.mxu0
    %v663 = vlaneseq
    %v664 = vshrl.u32 %v663, 7
    %v665 = vsub.s32 2, %v664
    %v666 = vrot.slane %v59, %v665
    %v667 = vadd.f32 %v657, %v666
    %v668 = vadd.f32 %v660, %v666
    %v669 = vadd.f32 %v41, %v667
    %v670 = vadd.f32 %v42, %v668
    %v671 = vsel %vm73, %v669, 0.0
    %672 = vadd.xlane.f32.xlu0 %v671
    %v673 = vpop.xlane.xlu0 %672
    %v674 = vsel %vm73, %v670, 0.0
    %675 = vadd.xlane.f32.xlu0 %v674
    %v676 = vpop.xlane.xlu0 %675
    %v677 = vrcp.pop 32.0
    %v678 = vmul.f32 %v673, %v677
    %v679 = vmul.f32 %v676, %v677
    %v680 = vsub.f32 %v669, %v678
    %v681 = vsub.f32 %v670, %v679
    %v682 = vmul.f32 %v680, %v680
    %v683 = vmul.f32 %v681, %v681
    %v684 = vsel %vm73, %v682, 0.0
    %685 = vadd.xlane.f32.xlu0 %v684
    %v686 = vpop.xlane.xlu0 %685
    %v687 = vsel %vm73, %v683, 0.0
    %688 = vadd.xlane.f32.xlu0 %v687
    %v689 = vpop.xlane.xlu0 %688
    %v690 = vmul.f32 %v686, %v677
    %v691 = vmul.f32 %v689, %v677
    %v692 = vadd.f32 %v690, 1e-05
    %v693 = vadd.f32 %v691, 1e-05
    %v694 = vrsqrt.pop %v692
    %v695 = vrsqrt.pop %v693
    %v696 = vmul.f32 %v680, %v694
    %v697 = vmul.f32 %v681, %v695
    %v698 = vlaneseq
    %v699 = vshrl.u32 %v698, 7
    %v700 = vsub.s32 3, %v699
    %v701 = vrot.slane %v59, %v700
    %v702 = vmul.f32 %v696, %v701
    %v703 = vmul.f32 %v697, %v701
    %v704 = vlaneseq
    %v705 = vshrl.u32 %v704, 7
    %v706 = vsub.s32 4, %v705
    %v707 = vrot.slane %v59, %v706
    %v708 = vadd.f32 %v702, %v707
    %v709 = vadd.f32 %v703, %v707
    %v710 = vpack.c.bf16 %v709, %v708
    %v711 = vlaneseq
    %v712 = vshrl.u32 %v711, 7
    %v713 = vsub.s32 1, %v712
    %v714 = vrot.slane %v59, %v713
    %v716 = vsel %vm73, %v710, 0
    %718 = vmatprep.subr.bf16.mxu0 0
    %719 = vmatpush1.bf16.msra.mxu0 %v62
    %720 = vmatprep.subr.bf16.mxu0 0
    %721 = vmatpush1.bf16.msra.mxu0 %v63
    %722 = vmatprep.subr.bf16.mxu0 0
    %723 = vmatpush1.bf16.msra.mxu0 0
    %724 = vmatprep.subr.bf16.mxu0 0
    %725 = vmatpush1.bf16.msra.mxu0 0
    %726 = vmatprep.subr.bf16.mxu0 0
    %727 = vmatpush1.bf16.msra.mxu0 0
    %728 = vmatprep.subr.bf16.mxu0 0
    %729 = vmatpush1.bf16.msra.mxu0 0
    %730 = vmatprep.subr.bf16.mxu0 0
    %731 = vmatpush1.bf16.msra.mxu0 0
    %732 = vmatprep.subr.bf16.mxu0 0
    %733 = vmatpush1.bf16.msra.mxu0 0
    %734 = vmatprep.subr.bf16.mxu0 0
    %735 = vmatpush1.bf16.msra.mxu0 0
    %736 = vmatprep.subr.bf16.mxu0 0
    %737 = vmatpush1.bf16.msra.mxu0 0
    %738 = vmatprep.subr.bf16.mxu0 0
    %739 = vmatpush1.bf16.msra.mxu0 0
    %740 = vmatprep.subr.bf16.mxu0 0
    %741 = vmatpush1.bf16.msra.mxu0 0
    %742 = vmatprep.subr.bf16.mxu0 0
    %743 = vmatpush1.bf16.msra.mxu0 0
    %744 = vmatprep.subr.bf16.mxu0 0
    %745 = vmatpush1.bf16.msra.mxu0 0
    %746 = vmatprep.subr.bf16.mxu0 0
    %747 = vmatpush1.bf16.msra.mxu0 0
    %748 = vmatprep.subr.bf16.mxu0 0
    %749 = vmatpush1.bf16.msra.mxu0 0
    %750 = vmatprep.mubr.bf16.mxu0 0
    %751 = vmatmul.mubr.bf16.gmra.mrb[0].mxu0 %v716
    %v752 = vpop.f32.mrb[0].mxu0
    %v753 = vadd.f32 %v714, %v752
    %v754 = vpop.f32.mrb[0].mxu0
    %v755 = vpop.f32.mrb[0].mxu0
    %v756 = vadd.f32 %v714, %v755
    %v757 = vpop.f32.mrb[0].mxu0
    %758 = vdwg.mxu0
    %v759 = vmax.f32 %v753, 0.0
    %v760 = vmax.f32 %v756, 0.0
    %v761 = vpack.c.bf16 %v760, %v759
    %v762 = vlaneseq
    %v763 = vshrl.u32 %v762, 7
    %v764 = vsub.s32 5, %v763
    %v765 = vrot.slane %v59, %v764
    %vm766 = vcmask 523264
    %v768 = vsel %vm766, %v761, 0
    %770 = vmatprep.subr.bf16.mxu0 0
    %771 = vmatpush1.bf16.msra.mxu0 %v64
    %772 = vmatprep.subr.bf16.mxu0 0
    %773 = vmatpush1.bf16.msra.mxu0 %v65
    %774 = vmatprep.subr.bf16.mxu0 0
    %775 = vmatpush1.bf16.msra.mxu0 %v66
    %776 = vmatprep.subr.bf16.mxu0 0
    %777 = vmatpush1.bf16.msra.mxu0 %v67
    %778 = vmatprep.subr.bf16.mxu0 0
    %779 = vmatpush1.bf16.msra.mxu0 0
    %780 = vmatprep.subr.bf16.mxu0 0
    %781 = vmatpush1.bf16.msra.mxu0 0
    %782 = vmatprep.subr.bf16.mxu0 0
    %783 = vmatpush1.bf16.msra.mxu0 0
    %784 = vmatprep.subr.bf16.mxu0 0
    %785 = vmatpush1.bf16.msra.mxu0 0
    %786 = vmatprep.subr.bf16.mxu0 0
    %787 = vmatpush1.bf16.msra.mxu0 0
    %788 = vmatprep.subr.bf16.mxu0 0
    %789 = vmatpush1.bf16.msra.mxu0 0
    %790 = vmatprep.subr.bf16.mxu0 0
    %791 = vmatpush1.bf16.msra.mxu0 0
    %792 = vmatprep.subr.bf16.mxu0 0
    %793 = vmatpush1.bf16.msra.mxu0 0
    %794 = vmatprep.subr.bf16.mxu0 0
    %795 = vmatpush1.bf16.msra.mxu0 0
    %796 = vmatprep.subr.bf16.mxu0 0
    %797 = vmatpush1.bf16.msra.mxu0 0
    %798 = vmatprep.subr.bf16.mxu0 0
    %799 = vmatpush1.bf16.msra.mxu0 0
    %800 = vmatprep.subr.bf16.mxu0 0
    %801 = vmatpush1.bf16.msra.mxu0 0
    %802 = vmatprep.mubr.bf16.mxu0 0
    %803 = vmatmul.mubr.bf16.gmra.mrb[0].mxu0 %v768
    %v804 = vpop.f32.mrb[0].mxu0
    %v805 = vadd.f32 %v765, %v804
    %v806 = vpop.f32.mrb[0].mxu0
    %v807 = vpop.f32.mrb[0].mxu0
    %v808 = vadd.f32 %v765, %v807
    %v809 = vpop.f32.mrb[0].mxu0
    %810 = vdwg.mxu0
    %v811 = vadd.f32 %v708, %v805
    %v812 = vadd.f32 %v709, %v808
    %v813 = vsel %vm73, %v811, 0.0
    %814 = vadd.xlane.f32.xlu0 %v813
    %v815 = vpop.xlane.xlu0 %814
    %v816 = vsel %vm73, %v812, 0.0
    %817 = vadd.xlane.f32.xlu0 %v816
    %v818 = vpop.xlane.xlu0 %817
    %v819 = vmul.f32 %v815, %v677
    %v820 = vmul.f32 %v818, %v677
    %v821 = vsub.f32 %v811, %v819
    %v822 = vsub.f32 %v812, %v820
    %v823 = vmul.f32 %v821, %v821
    %v824 = vmul.f32 %v822, %v822
    %v825 = vsel %vm73, %v823, 0.0
    %826 = vadd.xlane.f32.xlu0 %v825
    %v827 = vpop.xlane.xlu0 %826
    %v828 = vsel %vm73, %v824, 0.0
    %829 = vadd.xlane.f32.xlu0 %v828
    %v830 = vpop.xlane.xlu0 %829
    %v831 = vmul.f32 %v827, %v677
    %v832 = vmul.f32 %v830, %v677
    %v833 = vadd.f32 %v831, 1e-05
    %v834 = vadd.f32 %v832, 1e-05
    %v835 = vrsqrt.pop %v833
    %v836 = vrsqrt.pop %v834
    %v837 = vmul.f32 %v821, %v835
    %v838 = vmul.f32 %v822, %v836
    %v839 = vlaneseq
    %v840 = vshrl.u32 %v839, 7
    %v841 = vsub.s32 6, %v840
    %v842 = vrot.slane %v59, %v841
    %v843 = vmul.f32 %v837, %v842
    %v844 = vmul.f32 %v838, %v842
    %v845 = vlaneseq
    %v846 = vshrl.u32 %v845, 7
    %v847 = vsub.s32 7, %v846
    %v848 = vrot.slane %v59, %v847
    %v849 = vadd.f32 %v843, %v848
    %v850 = vadd.f32 %v844, %v848
    %851 = vst.msk [vmem:[#allocation7] sm:$0xff] %vm73, %v849
    %852 = vst.msk [vmem:[#allocation7 + $0x8] sm:$0xff] %vm73, %v850
    // Predicated region
    $region18: #{tpu_custom_call.1} parent=1 // pred_check
      _
    $region19: #{tpu_custom_call.1} parent=1 // pred_check_branch
      %854 = sbr.rel (0) target = $region21
    $region20: #{tpu_custom_call.1} parent=1 // pred_region
      %s856 = ssub.s32 256, 256
      %857 = vsyncadd [#allocation4], %s856
      %s858 = sshll.u32 [#allocation7], 4
      %s859 = int_to_ptr.vmem [resolvable:$true] %s858
      %864 = dma.vmem_to_hbm [thread:$0]  %s859, 256, %s2, [#allocation4], 128, 128, 8
    $region21: #{tpu_custom_call.1} parent=1 // pred_fallthru
      _
    // Predicated region
    $region22: #{tpu_custom_call.1} parent=1 // pred_check
      _
    $region23: #{tpu_custom_call.1} parent=1 // pred_check_branch
      %866 = sbr.rel (0) target = $region25
    $region24: #{tpu_custom_call.1} parent=1 // pred_region
      %867 = dma.done [#allocation4], 256
    $region25: #{tpu_custom_call.1} parent=1 // pred_fallthru
      _
    %868 = vsyncpa [#allocation3], 1
    %869 = vsyncpa [#allocation6], 1
    %870 = vsyncpa [#allocation4], 1

</llo_original>
